<compile_context>
chip_gen: v5e
topology: v5e:2x2
jax: 0.10.0
libtpu: 0.0.40
codegen_flags: <defaults>
</compile_context>

<pallas_src>
import jax
import jax.numpy as jnp
from jax.experimental import pallas as pl
from jax.experimental.pallas import tpu as pltpu


def _round_up(v, m):
    return (v + m - 1) // m * m


def _pick_lane_tile(L_pad):
    """Largest tile in {1024, 512, 256, 128} dividing L_pad (L_pad % 128 == 0).

    Capped at 1024 so the C halo'd channel slabs held as values fit in vregs."""
    for lb in (1024, 512, 256, 128):
        if L_pad % lb == 0:
            return lb
    return 128  # unreachable: L_pad is always a multiple of 128


def _make_kernel(C, NB, LB, K, pad):
    def kernel(w_ref, x_ref, h_ref, o_ref):
        # w_ref: (C*K,)            f32 SMEM (scalar prefetch)
        # x_ref: (NB*C, LB)        f32 VMEM, rows ordered n-major: row = n*C + c
        # h_ref: (1, C, NB, 2*pad) f32 VMEM: [left pad cols | right pad cols]
        # o_ref: (NB, LB)          f32 VMEM, lane/sublane-dense output tile

        # Per-channel dense (NB, LB(+2*pad)) slabs held as values:
        #   - channel rows via ONE sublane-strided vld each (no relayout),
        #   - the "same"-padding halo concatenated in-register (no scratch).
        slabs = []
        for c in range(C):
            xc = x_ref[pl.ds(c, NB, stride=C), :]            # aligned strided vld
            if pad > 0:
                hc = h_ref[0, c]                             # (NB, 2*pad)
                slabs.append(jnp.concatenate(
                    [hc[:, 0:pad], xc, hc[:, pad:2 * pad]], axis=-1))
            else:
                slabs.append(xc)

        # Tap-major MAC: aligned weighted channel sum, then ONE shifted slice
        # per tap => K unaligned lane accesses per tile instead of C*K.
        acc = jnp.zeros((NB, LB), jnp.float32)
        for k in range(K):
            zk = slabs[0] * w_ref[k]
            for c in range(1, C):
                zk = zk + slabs[c] * w_ref[c * K + k]
            acc = acc + zk[:, k:k + LB]

        # Nonlinearity on the EUP; dense (NB, LB) store.
        o_ref[...] = jnp.tanh(acc).astype(o_ref.dtype)

    return kernel


def wiener_cascade_decoder_conv(x, weight):
    """x: (N, C, L) float32.  weight: (1, C, K) float32 (PyTorch Conv1d layout).
    Returns tanh(conv1d(x, weight, padding=K//2, bias=None)): shape (N, 1, L)."""
    N, C, L = x.shape
    K = weight.shape[-1]
    assert K % 2 == 1, "same-length conv requires an odd kernel_size"
    pad = K // 2

    x = x.astype(jnp.float32)
    w_flat = weight.reshape(C * K).astype(jnp.float32)       # -> SMEM scalars

    NB = 8                          # batch rows fill the 8 sublanes (dense stores)
    N_pad = _round_up(N, NB)
    L_pad = _round_up(L, 128)       # lane-dense tiles
    LB = _pick_lane_tile(L_pad)
    n_n = N_pad // NB
    n_l = L_pad // LB
    assert pad < LB

    if N_pad != N or L_pad != L:
        # TODO(synk): a masked ragged last tile would avoid this pad copy for
        # awkward shapes; already-aligned shapes take this copy-free branch.
        x_p = jnp.pad(x, ((0, N_pad - N), (0, 0), (0, L_pad - L)))
    else:
        x_p = x

    # Tiny cross-tile halo gather (~2*pad/LB of x read, NOT a full HBM pass):
    # halos[j] = [last pad cols of L-tile j-1 | first pad cols of L-tile j+1],
    # zeros at the sequence edges (= the Conv1d "same" zero padding).
    hw = 2 * pad if pad > 0 else 2
    if pad > 0:
        xr = x_p.reshape(N_pad, C, n_l, LB)
        zeros_h = jnp.zeros((N_pad, C, 1, pad), jnp.float32)
        left = jnp.concatenate([zeros_h, xr[:, :, :-1, LB - pad:]], axis=2)
        right = jnp.concatenate([xr[:, :, 1:, :pad], zeros_h], axis=2)
        halos = jnp.transpose(jnp.concatenate([left, right], axis=3),
                              (2, 1, 0, 3))                  # (n_l, C, N_pad, 2*pad)
    else:
        halos = jnp.zeros((n_l, C, N_pad, hw), jnp.float32)

    # Free view (contiguous leading-dim merge): row = n*C + c.  No HBM relayout.
    x_flat = x_p.reshape(N_pad * C, L_pad)

    kernel = _make_kernel(C, NB, LB, K, pad)

    # VMEM: tiny double-buffered blocks (+ layout padding), bounded independent
    # of L.  Derive the ceiling from the actual chip (v7x 64 MiB physical vs
    # v5e/v6e 128 MiB) instead of hardcoding.
    blk_bytes = 4 * (2 * NB * C * LB                      # x tiles (dense rows)
                     + 2 * NB * LB                        # out tiles
                     + 2 * _round_up(C, 8) * NB * 128)    # halo tiles (layout-padded)
    try:
        vmem_cap = int(pltpu.get_tpu_info().vmem_capacity_bytes)
    except Exception:
        vmem_cap = 64 << 20                               # conservative fallback
    vmem_limit = int(min(max(blk_bytes + (4 << 20), 8 << 20),
                         int(vmem_cap * 0.85)))

    out2d = pl.pallas_call(
        kernel,
        out_shape=jax.ShapeDtypeStruct((N_pad, L_pad), jnp.float32),
        grid_spec=pltpu.PrefetchScalarGridSpec(
            num_scalar_prefetch=1,                        # conv weights -> SMEM
            grid=(n_n, n_l),
            in_specs=[
                pl.BlockSpec((NB * C, LB), lambda i, j, w: (i, j)),
                pl.BlockSpec((1, C, NB, hw), lambda i, j, w: (j, 0, i, 0)),
            ],
            out_specs=pl.BlockSpec((NB, LB), lambda i, j, w: (i, j)),
        ),
        compiler_params=pltpu.CompilerParams(
            dimension_semantics=("parallel", "parallel"),
            vmem_limit_bytes=vmem_limit),
    )(w_flat, x_flat, halos)

    return out2d[:N, :L][:, None, :]


def _reference(x, weight):
    """Pure-JAX reference of the PyTorch forward (for correctness check)."""
    N, C, L = x.shape
    K = weight.shape[-1]
    pad = K // 2
    x_pad = jnp.pad(x, ((0, 0), (0, 0), (pad, pad)))
    w = weight[0]                                         # (C, K)
    out = sum(jnp.sum(x_pad[:, :, k:k + L] * w[None, :, k:k + 1], axis=1)
              for k in range(K))                          # (N, L)
    return jnp.tanh(out)[:, None, :]                      # (N, 1, L)


if __name__ == "__main__":
    # Shapes consistent with the module: kernel_size = T = 7, n_components = 4.
    configs = [
        (2, 4, 16, 7),      # shipped tiny shape (pads N->8, L->128, single tile)
        (16, 4, 2048, 7),   # aligned shapes: copy-free path, 2x2 grid, cross-tile halos
        (3, 4, 384, 7),     # ragged N, three L tiles of 128 (interior halos)
    ]

    key = jax.random.PRNGKey(0)
    for idx, (N, C, L, K) in enumerate(configs):
        key, kx, kw = jax.random.split(key, 3)
        x = jax.random.normal(kx, (N, C, L), dtype=jnp.float32)
        # Conv1d weight, PyTorch shape (out_channels=1, C, K), kaiming-like scale.
        bound = 1.0 / jnp.sqrt(jnp.float32(C * K))
        weight = jax.random.uniform(kw, (1, C, K), dtype=jnp.float32,
                                    minval=-bound, maxval=bound)

        out = jax.block_until_ready(wiener_cascade_decoder_conv(x, weight))
        ref = _reference(x, weight)

        assert out.shape == (N, 1, L), (idx, out.shape)
        err = jnp.max(jnp.abs(out - ref))
        assert jnp.allclose(out, ref, atol=1e-5, rtol=1e-5), \
            f"config {idx}: max err {err}"

    print("KERNEL_OK")
</pallas_src>

<mosaic_0001>
module attributes {stable_mosaic.version = 11 : i64} {
  func.func @kernel(%arg0: i32, %arg1: i32, %arg2: memref<28xf32, #tpu.memory_space<smem>>, %arg3: memref<32x128xf32, #tpu.memory_space<vmem>>, %arg4: memref<1x4x8x6xf32, #tpu.memory_space<vmem>>, %arg5: memref<8x128xf32, #tpu.memory_space<vmem>>) attributes {dimension_semantics = [#tpu.dimension_semantics<parallel>, #tpu.dimension_semantics<parallel>], iteration_bounds = array<i64: 1, 1>, scalar_prefetch = 1 : i64, scratch_operands = 0 : i64, tpu.core_type = #tpu.core_type<tc>, window_params = [{transform_indices = @transform_0, window_bounds = array<i64: 32, 128>}, {transform_indices = @transform_1, window_bounds = array<i64: 1, 4, 8, 6>}, {transform_indices = @transform_2, window_bounds = array<i64: 8, 128>}]} {
    %c0 = arith.constant 0 : index
    %c0_0 = arith.constant 0 : index
    %0 = tpu.strided_load %arg3[%c0, %c0_0] {strides = array<i32: 4, 1>} : memref<32x128xf32, #tpu.memory_space<vmem>>, vector<8x128xf32>
    %c0_1 = arith.constant 0 : index
    %c0_2 = arith.constant 0 : index
    %c0_3 = arith.constant 0 : index
    %c0_4 = arith.constant 0 : index
    %1 = vector.load %arg4[%c0_1, %c0_2, %c0_3, %c0_4] : memref<1x4x8x6xf32, #tpu.memory_space<vmem>>, vector<1x1x8x6xf32>
    %2 = vector.shape_cast %1 : vector<1x1x8x6xf32> to vector<8x6xf32>
    %3 = vector.extract_strided_slice %2 {offsets = [0, 0], sizes = [8, 3], strides = [1, 1]} : vector<8x6xf32> to vector<8x3xf32>
    %4 = vector.extract_strided_slice %2 {offsets = [0, 3], sizes = [8, 3], strides = [1, 1]} : vector<8x6xf32> to vector<8x3xf32>
    %5 = tpu.concatenate %3, %0, %4 in 1 : vector<8x3xf32>, vector<8x128xf32>, vector<8x3xf32> -> vector<8x134xf32>
    %c1 = arith.constant 1 : index
    %c0_5 = arith.constant 0 : index
    %6 = tpu.strided_load %arg3[%c1, %c0_5] {strides = array<i32: 4, 1>} : memref<32x128xf32, #tpu.memory_space<vmem>>, vector<8x128xf32>
    %c0_6 = arith.constant 0 : index
    %c1_7 = arith.constant 1 : index
    %c0_8 = arith.constant 0 : index
    %c0_9 = arith.constant 0 : index
    %7 = vector.load %arg4[%c0_6, %c1_7, %c0_8, %c0_9] : memref<1x4x8x6xf32, #tpu.memory_space<vmem>>, vector<1x1x8x6xf32>
    %8 = vector.shape_cast %7 : vector<1x1x8x6xf32> to vector<8x6xf32>
    %9 = vector.extract_strided_slice %8 {offsets = [0, 0], sizes = [8, 3], strides = [1, 1]} : vector<8x6xf32> to vector<8x3xf32>
    %10 = vector.extract_strided_slice %8 {offsets = [0, 3], sizes = [8, 3], strides = [1, 1]} : vector<8x6xf32> to vector<8x3xf32>
    %11 = tpu.concatenate %9, %6, %10 in 1 : vector<8x3xf32>, vector<8x128xf32>, vector<8x3xf32> -> vector<8x134xf32>
    %c2 = arith.constant 2 : index
    %c0_10 = arith.constant 0 : index
    %12 = tpu.strided_load %arg3[%c2, %c0_10] {strides = array<i32: 4, 1>} : memref<32x128xf32, #tpu.memory_space<vmem>>, vector<8x128xf32>
    %c0_11 = arith.constant 0 : index
    %c2_12 = arith.constant 2 : index
    %c0_13 = arith.constant 0 : index
    %c0_14 = arith.constant 0 : index
    %13 = vector.load %arg4[%c0_11, %c2_12, %c0_13, %c0_14] : memref<1x4x8x6xf32, #tpu.memory_space<vmem>>, vector<1x1x8x6xf32>
    %14 = vector.shape_cast %13 : vector<1x1x8x6xf32> to vector<8x6xf32>
    %15 = vector.extract_strided_slice %14 {offsets = [0, 0], sizes = [8, 3], strides = [1, 1]} : vector<8x6xf32> to vector<8x3xf32>
    %16 = vector.extract_strided_slice %14 {offsets = [0, 3], sizes = [8, 3], strides = [1, 1]} : vector<8x6xf32> to vector<8x3xf32>
    %17 = tpu.concatenate %15, %12, %16 in 1 : vector<8x3xf32>, vector<8x128xf32>, vector<8x3xf32> -> vector<8x134xf32>
    %c3 = arith.constant 3 : index
    %c0_15 = arith.constant 0 : index
    %18 = tpu.strided_load %arg3[%c3, %c0_15] {strides = array<i32: 4, 1>} : memref<32x128xf32, #tpu.memory_space<vmem>>, vector<8x128xf32>
    %c0_16 = arith.constant 0 : index
    %c3_17 = arith.constant 3 : index
    %c0_18 = arith.constant 0 : index
    %c0_19 = arith.constant 0 : index
    %19 = vector.load %arg4[%c0_16, %c3_17, %c0_18, %c0_19] : memref<1x4x8x6xf32, #tpu.memory_space<vmem>>, vector<1x1x8x6xf32>
    %20 = vector.shape_cast %19 : vector<1x1x8x6xf32> to vector<8x6xf32>
    %21 = vector.extract_strided_slice %20 {offsets = [0, 0], sizes = [8, 3], strides = [1, 1]} : vector<8x6xf32> to vector<8x3xf32>
    %22 = vector.extract_strided_slice %20 {offsets = [0, 3], sizes = [8, 3], strides = [1, 1]} : vector<8x6xf32> to vector<8x3xf32>
    %23 = tpu.concatenate %21, %18, %22 in 1 : vector<8x3xf32>, vector<8x128xf32>, vector<8x3xf32> -> vector<8x134xf32>
    %cst = arith.constant 0.000000e+00 : f32
    %24 = vector.broadcast %cst : f32 to vector<8x128xf32>
    %c0_20 = arith.constant 0 : index
    %25 = memref.load %arg2[%c0_20] : memref<28xf32, #tpu.memory_space<smem>>
    %26 = vector.broadcast %25 : f32 to vector<8x134xf32>
    %27 = arith.mulf %5, %26 : vector<8x134xf32>
    %c7 = arith.constant 7 : index
    %28 = memref.load %arg2[%c7] : memref<28xf32, #tpu.memory_space<smem>>
    %29 = vector.broadcast %28 : f32 to vector<8x134xf32>
    %30 = arith.mulf %11, %29 : vector<8x134xf32>
    %31 = arith.addf %27, %30 : vector<8x134xf32>
    %c14 = arith.constant 14 : index
    %32 = memref.load %arg2[%c14] : memref<28xf32, #tpu.memory_space<smem>>
    %33 = vector.broadcast %32 : f32 to vector<8x134xf32>
    %34 = arith.mulf %17, %33 : vector<8x134xf32>
    %35 = arith.addf %31, %34 : vector<8x134xf32>
    %c21 = arith.constant 21 : index
    %36 = memref.load %arg2[%c21] : memref<28xf32, #tpu.memory_space<smem>>
    %37 = vector.broadcast %36 : f32 to vector<8x134xf32>
    %38 = arith.mulf %23, %37 : vector<8x134xf32>
    %39 = arith.addf %35, %38 : vector<8x134xf32>
    %40 = vector.extract_strided_slice %39 {offsets = [0, 0], sizes = [8, 128], strides = [1, 1]} : vector<8x134xf32> to vector<8x128xf32>
    %41 = arith.addf %24, %40 : vector<8x128xf32>
    %c1_21 = arith.constant 1 : index
    %42 = memref.load %arg2[%c1_21] : memref<28xf32, #tpu.memory_space<smem>>
    %43 = vector.broadcast %42 : f32 to vector<8x134xf32>
    %44 = arith.mulf %5, %43 : vector<8x134xf32>
    %c8 = arith.constant 8 : index
    %45 = memref.load %arg2[%c8] : memref<28xf32, #tpu.memory_space<smem>>
    %46 = vector.broadcast %45 : f32 to vector<8x134xf32>
    %47 = arith.mulf %11, %46 : vector<8x134xf32>
    %48 = arith.addf %44, %47 : vector<8x134xf32>
    %c15 = arith.constant 15 : index
    %49 = memref.load %arg2[%c15] : memref<28xf32, #tpu.memory_space<smem>>
    %50 = vector.broadcast %49 : f32 to vector<8x134xf32>
    %51 = arith.mulf %17, %50 : vector<8x134xf32>
    %52 = arith.addf %48, %51 : vector<8x134xf32>
    %c22 = arith.constant 22 : index
    %53 = memref.load %arg2[%c22] : memref<28xf32, #tpu.memory_space<smem>>
    %54 = vector.broadcast %53 : f32 to vector<8x134xf32>
    %55 = arith.mulf %23, %54 : vector<8x134xf32>
    %56 = arith.addf %52, %55 : vector<8x134xf32>
    %57 = vector.extract_strided_slice %56 {offsets = [0, 1], sizes = [8, 128], strides = [1, 1]} : vector<8x134xf32> to vector<8x128xf32>
    %58 = arith.addf %41, %57 : vector<8x128xf32>
    %c2_22 = arith.constant 2 : index
    %59 = memref.load %arg2[%c2_22] : memref<28xf32, #tpu.memory_space<smem>>
    %60 = vector.broadcast %59 : f32 to vector<8x134xf32>
    %61 = arith.mulf %5, %60 : vector<8x134xf32>
    %c9 = arith.constant 9 : index
    %62 = memref.load %arg2[%c9] : memref<28xf32, #tpu.memory_space<smem>>
    %63 = vector.broadcast %62 : f32 to vector<8x134xf32>
    %64 = arith.mulf %11, %63 : vector<8x134xf32>
    %65 = arith.addf %61, %64 : vector<8x134xf32>
    %c16 = arith.constant 16 : index
    %66 = memref.load %arg2[%c16] : memref<28xf32, #tpu.memory_space<smem>>
    %67 = vector.broadcast %66 : f32 to vector<8x134xf32>
    %68 = arith.mulf %17, %67 : vector<8x134xf32>
    %69 = arith.addf %65, %68 : vector<8x134xf32>
    %c23 = arith.constant 23 : index
    %70 = memref.load %arg2[%c23] : memref<28xf32, #tpu.memory_space<smem>>
    %71 = vector.broadcast %70 : f32 to vector<8x134xf32>
    %72 = arith.mulf %23, %71 : vector<8x134xf32>
    %73 = arith.addf %69, %72 : vector<8x134xf32>
    %74 = vector.extract_strided_slice %73 {offsets = [0, 2], sizes = [8, 128], strides = [1, 1]} : vector<8x134xf32> to vector<8x128xf32>
    %75 = arith.addf %58, %74 : vector<8x128xf32>
    %c3_23 = arith.constant 3 : index
    %76 = memref.load %arg2[%c3_23] : memref<28xf32, #tpu.memory_space<smem>>
    %77 = vector.broadcast %76 : f32 to vector<8x134xf32>
    %78 = arith.mulf %5, %77 : vector<8x134xf32>
    %c10 = arith.constant 10 : index
    %79 = memref.load %arg2[%c10] : memref<28xf32, #tpu.memory_space<smem>>
    %80 = vector.broadcast %79 : f32 to vector<8x134xf32>
    %81 = arith.mulf %11, %80 : vector<8x134xf32>
    %82 = arith.addf %78, %81 : vector<8x134xf32>
    %c17 = arith.constant 17 : index
    %83 = memref.load %arg2[%c17] : memref<28xf32, #tpu.memory_space<smem>>
    %84 = vector.broadcast %83 : f32 to vector<8x134xf32>
    %85 = arith.mulf %17, %84 : vector<8x134xf32>
    %86 = arith.addf %82, %85 : vector<8x134xf32>
    %c24 = arith.constant 24 : index
    %87 = memref.load %arg2[%c24] : memref<28xf32, #tpu.memory_space<smem>>
    %88 = vector.broadcast %87 : f32 to vector<8x134xf32>
    %89 = arith.mulf %23, %88 : vector<8x134xf32>
    %90 = arith.addf %86, %89 : vector<8x134xf32>
    %91 = vector.extract_strided_slice %90 {offsets = [0, 3], sizes = [8, 128], strides = [1, 1]} : vector<8x134xf32> to vector<8x128xf32>
    %92 = arith.addf %75, %91 : vector<8x128xf32>
    %c4 = arith.constant 4 : index
    %93 = memref.load %arg2[%c4] : memref<28xf32, #tpu.memory_space<smem>>
    %94 = vector.broadcast %93 : f32 to vector<8x134xf32>
    %95 = arith.mulf %5, %94 : vector<8x134xf32>
    %c11 = arith.constant 11 : index
    %96 = memref.load %arg2[%c11] : memref<28xf32, #tpu.memory_space<smem>>
    %97 = vector.broadcast %96 : f32 to vector<8x134xf32>
    %98 = arith.mulf %11, %97 : vector<8x134xf32>
    %99 = arith.addf %95, %98 : vector<8x134xf32>
    %c18 = arith.constant 18 : index
    %100 = memref.load %arg2[%c18] : memref<28xf32, #tpu.memory_space<smem>>
    %101 = vector.broadcast %100 : f32 to vector<8x134xf32>
    %102 = arith.mulf %17, %101 : vector<8x134xf32>
    %103 = arith.addf %99, %102 : vector<8x134xf32>
    %c25 = arith.constant 25 : index
    %104 = memref.load %arg2[%c25] : memref<28xf32, #tpu.memory_space<smem>>
    %105 = vector.broadcast %104 : f32 to vector<8x134xf32>
    %106 = arith.mulf %23, %105 : vector<8x134xf32>
    %107 = arith.addf %103, %106 : vector<8x134xf32>
    %108 = vector.extract_strided_slice %107 {offsets = [0, 4], sizes = [8, 128], strides = [1, 1]} : vector<8x134xf32> to vector<8x128xf32>
    %109 = arith.addf %92, %108 : vector<8x128xf32>
    %c5 = arith.constant 5 : index
    %110 = memref.load %arg2[%c5] : memref<28xf32, #tpu.memory_space<smem>>
    %111 = vector.broadcast %110 : f32 to vector<8x134xf32>
    %112 = arith.mulf %5, %111 : vector<8x134xf32>
    %c12 = arith.constant 12 : index
    %113 = memref.load %arg2[%c12] : memref<28xf32, #tpu.memory_space<smem>>
    %114 = vector.broadcast %113 : f32 to vector<8x134xf32>
    %115 = arith.mulf %11, %114 : vector<8x134xf32>
    %116 = arith.addf %112, %115 : vector<8x134xf32>
    %c19 = arith.constant 19 : index
    %117 = memref.load %arg2[%c19] : memref<28xf32, #tpu.memory_space<smem>>
    %118 = vector.broadcast %117 : f32 to vector<8x134xf32>
    %119 = arith.mulf %17, %118 : vector<8x134xf32>
    %120 = arith.addf %116, %119 : vector<8x134xf32>
    %c26 = arith.constant 26 : index
    %121 = memref.load %arg2[%c26] : memref<28xf32, #tpu.memory_space<smem>>
    %122 = vector.broadcast %121 : f32 to vector<8x134xf32>
    %123 = arith.mulf %23, %122 : vector<8x134xf32>
    %124 = arith.addf %120, %123 : vector<8x134xf32>
    %125 = vector.extract_strided_slice %124 {offsets = [0, 5], sizes = [8, 128], strides = [1, 1]} : vector<8x134xf32> to vector<8x128xf32>
    %126 = arith.addf %109, %125 : vector<8x128xf32>
    %c6 = arith.constant 6 : index
    %127 = memref.load %arg2[%c6] : memref<28xf32, #tpu.memory_space<smem>>
    %128 = vector.broadcast %127 : f32 to vector<8x134xf32>
    %129 = arith.mulf %5, %128 : vector<8x134xf32>
    %c13 = arith.constant 13 : index
    %130 = memref.load %arg2[%c13] : memref<28xf32, #tpu.memory_space<smem>>
    %131 = vector.broadcast %130 : f32 to vector<8x134xf32>
    %132 = arith.mulf %11, %131 : vector<8x134xf32>
    %133 = arith.addf %129, %132 : vector<8x134xf32>
    %c20 = arith.constant 20 : index
    %134 = memref.load %arg2[%c20] : memref<28xf32, #tpu.memory_space<smem>>
    %135 = vector.broadcast %134 : f32 to vector<8x134xf32>
    %136 = arith.mulf %17, %135 : vector<8x134xf32>
    %137 = arith.addf %133, %136 : vector<8x134xf32>
    %c27 = arith.constant 27 : index
    %138 = memref.load %arg2[%c27] : memref<28xf32, #tpu.memory_space<smem>>
    %139 = vector.broadcast %138 : f32 to vector<8x134xf32>
    %140 = arith.mulf %23, %139 : vector<8x134xf32>
    %141 = arith.addf %137, %140 : vector<8x134xf32>
    %142 = vector.extract_strided_slice %141 {offsets = [0, 6], sizes = [8, 128], strides = [1, 1]} : vector<8x134xf32> to vector<8x128xf32>
    %143 = arith.addf %126, %142 : vector<8x128xf32>
    %144 = math.tanh %143 : vector<8x128xf32>
    %c0_24 = arith.constant 0 : index
    %c0_25 = arith.constant 0 : index
    %145 = vector.load %arg5[%c0_24, %c0_25] : memref<8x128xf32, #tpu.memory_space<vmem>>, vector<8x128xf32>
    tpu.vector_store %arg5[%c0_24, %c0_25], %144 {strides = array<i32>} : memref<8x128xf32, #tpu.memory_space<vmem>>, vector<8x128xf32>,
    return
  }
  func.func @transform_0(%arg0: i32, %arg1: i32, %arg2: memref<28xf32, #tpu.memory_space<smem>>) -> (i32, i32) {
    %c0_i32 = arith.constant 0 : i32
    return %arg0, %arg1 : i32, i32
  }
  func.func @transform_1(%arg0: i32, %arg1: i32, %arg2: memref<28xf32, #tpu.memory_space<smem>>) -> (i32, i32, i32, i32) {
    %c0_i32 = arith.constant 0 : i32
    %c0_i32_0 = arith.constant 0 : i32
    %c0_i32_1 = arith.constant 0 : i32
    return %arg1, %c0_i32, %arg0, %c0_i32_0 : i32, i32, i32, i32
  }
  func.func @transform_2(%arg0: i32, %arg1: i32, %arg2: memref<28xf32, #tpu.memory_space<smem>>) -> (i32, i32) {
    %c0_i32 = arith.constant 0 : i32
    return %arg0, %arg1 : i32, i32
  }
}

</mosaic_0001>

<llo_original>
// kernel: tpu_custom_call.1
$region0: #{tpu_custom_call.1}
  #allocation0 [shape = 'u32[]', space=smem, size = 0x4, offset = 0x4, fixed_abs, tag = 'smem constant byte address 0x4 - core index']
  #allocation1 [shape = 'u32[72,128]{1,0:T(1,128)}', space=vmem, size = 0x9000, scoped, tag = 'internal scratch']
  #allocation2 [shape = 's32[1]{0}', space=sflag, size = 0x4, scoped, tag = 'scoped memory for tpu_custom_call.1']
  #allocation3 [shape = 'u8[512]{0}', space=smem, size = 0x200, scoped, tag = 'prefetched SMEM operand 0']
  %s0 = inlined_call_operand.vmem [shape: f32[28], index: 0, kind: input, shape index: {}]
  %s1 = inlined_call_operand.vmem [shape: f32[32,128], index: 1, kind: input, shape index: {}]
  %s2 = inlined_call_operand.vmem [shape: f32[1,4,8,6], index: 2, kind: input, shape index: {}]
  %s3 = inlined_call_operand.hbm [shape: f32[8,128], index: 3, kind: output, shape index: {}]
  %s4 = sld [smem:[#allocation0]]
  $region18: #{tpu_custom_call.1} parent=0
    _
  %s6 = ssub.s32 1, %s4
  %s7 = scalar_select 0, %s6, %s4
  %s9 = sshll.u32 %s0, 4
  %s10 = int_to_ptr.vmem [resolvable:$true] %s9
  %12 = dma.vmem_to_smem %s10, 16, [#allocation3], [#allocation2]
  %14 = dma.done [#allocation2], 16
  %15 = sfence
  $region1: #{tpu_custom_call.1} parent=0
    #allocation4 [shape = 'u8[4096]{0}', space=vmem, size = 0x1000, scoped, tag = 'output window, operand 0, single buffered']
    #allocation5 [shape = 's32[1]{0}', space=sflag, size = 0x4, scoped, tag = 'scoped memory for tpu_custom_call.1']
    %16 = vsyncpa [#allocation5], 0
    // Predicated region
    $region2: #{tpu_custom_call.1} parent=1 // pred_check
      _
    $region3: #{tpu_custom_call.1} parent=1 // pred_check_branch
      %18 = sbr.rel (0) target = $region5
    $region4: #{tpu_custom_call.1} parent=1 // pred_region
      _
    $region5: #{tpu_custom_call.1} parent=1 // pred_fallthru
      _
    // Predicated region
    $region6: #{tpu_custom_call.1} parent=1 // pred_check
      _
    $region7: #{tpu_custom_call.1} parent=1 // pred_check_branch
      %20 = sbr.rel (0) target = $region9
    $region8: #{tpu_custom_call.1} parent=1 // pred_region
      _
    $region9: #{tpu_custom_call.1} parent=1 // pred_fallthru
      _
    %v21 = vld [vmem:[%s1] ss:$4 sm:$0xff]
    %v22 = vld [vmem:[%s2] sm:$0xff]
    %24 = vrot.lane.b32.xlu0 %v21, 3
    %v25 = vpop.permute.xlu0 %24
    %vm27 = vcmask 23552
    %v28 = vsel %vm27, %v22, %v25
    %v29 = vsel %vm27, %v25, %v22
    %s30 = scalar_lea.vmem %s1, 1
    %v31 = vld [vmem:[%s30] ss:$4 sm:$0xff]
    %s32 = scalar_lea.vmem %s2, 8
    %v33 = vld [vmem:[%s32] sm:$0xff]
    %35 = vrot.lane.b32.xlu0 %v31, 3
    %v36 = vpop.permute.xlu0 %35
    %v38 = vsel %vm27, %v33, %v36
    %v39 = vsel %vm27, %v36, %v33
    %s40 = scalar_lea.vmem %s1, 2
    %v41 = vld [vmem:[%s40] ss:$4 sm:$0xff]
    %s42 = scalar_lea.vmem %s2, 16
    %v43 = vld [vmem:[%s42] sm:$0xff]
    %45 = vrot.lane.b32.xlu0 %v41, 3
    %v46 = vpop.permute.xlu0 %45
    %v48 = vsel %vm27, %v43, %v46
    %v49 = vsel %vm27, %v46, %v43
    %s50 = scalar_lea.vmem %s1, 3
    %v51 = vld [vmem:[%s50] ss:$4 sm:$0xff]
    %s52 = scalar_lea.vmem %s2, 24
    %v53 = vld [vmem:[%s52] sm:$0xff]
    %55 = vrot.lane.b32.xlu0 %v51, 3
    %v56 = vpop.permute.xlu0 %55
    %v58 = vsel %vm27, %v53, %v56
    %v59 = vsel %vm27, %v56, %v53
    %s60 = sld [smem:[#allocation3]]
    %v61 = vstv %s60
    %v62 = vmul.f32 %v28, %v61
    %s63 = sld [smem:[#allocation3 + $0x7]]
    %v64 = vstv %s63
    %v65 = vmul.f32 %v38, %v64
    %v66 = vadd.f32 %v62, %v65
    %s67 = sld [smem:[#allocation3 + $0xe]]
    %v68 = vstv %s67
    %v69 = vmul.f32 %v48, %v68
    %v70 = vadd.f32 %v66, %v69
    %s71 = sld [smem:[#allocation3 + $0x15]]
    %v72 = vstv %s71
    %v73 = vmul.f32 %v58, %v72
    %v74 = vadd.f32 %v70, %v73
    %v75 = vadd.f32 %v74, 0.0
    %s76 = sld [smem:[#allocation3 + $0x1]]
    %v77 = vstv %s76
    %v78 = vmul.f32 %v28, %v77
    %v79 = vmul.f32 %v29, %v77
    %s80 = sld [smem:[#allocation3 + $0x8]]
    %v81 = vstv %s80
    %v82 = vmul.f32 %v38, %v81
    %v83 = vmul.f32 %v39, %v81
    %v84 = vadd.f32 %v78, %v82
    %v85 = vadd.f32 %v79, %v83
    %s86 = sld [smem:[#allocation3 + $0xf]]
    %v87 = vstv %s86
    %v88 = vmul.f32 %v48, %v87
    %v89 = vmul.f32 %v49, %v87
    %v90 = vadd.f32 %v84, %v88
    %v91 = vadd.f32 %v85, %v89
    %s92 = sld [smem:[#allocation3 + $0x16]]
    %v93 = vstv %s92
    %v94 = vmul.f32 %v58, %v93
    %v95 = vmul.f32 %v59, %v93
    %v96 = vadd.f32 %v90, %v94
    %v97 = vadd.f32 %v91, %v95
    %100 = vrot.lane.b32.xlu0 %v96, 127
    %v101 = vpop.permute.xlu0 %100
    %102 = vrot.lane.b32.xlu0 %v97, 127
    %v103 = vpop.permute.xlu0 %102
    %vm104 = vcmask 1039360
    %v105 = vsel %vm104, %v101, %v103
    %v107 = vadd.f32 %v75, %v105
    %s108 = sld [smem:[#allocation3 + $0x2]]
    %v109 = vstv %s108
    %v110 = vmul.f32 %v28, %v109
    %v111 = vmul.f32 %v29, %v109
    %s112 = sld [smem:[#allocation3 + $0x9]]
    %v113 = vstv %s112
    %v114 = vmul.f32 %v38, %v113
    %v115 = vmul.f32 %v39, %v113
    %v116 = vadd.f32 %v110, %v114
    %v117 = vadd.f32 %v111, %v115
    %s118 = sld [smem:[#allocation3 + $0x10]]
    %v119 = vstv %s118
    %v120 = vmul.f32 %v48, %v119
    %v121 = vmul.f32 %v49, %v119
    %v122 = vadd.f32 %v116, %v120
    %v123 = vadd.f32 %v117, %v121
    %s124 = sld [smem:[#allocation3 + $0x17]]
    %v125 = vstv %s124
    %v126 = vmul.f32 %v58, %v125
    %v127 = vmul.f32 %v59, %v125
    %v128 = vadd.f32 %v122, %v126
    %v129 = vadd.f32 %v123, %v127
    %132 = vrot.lane.b32.xlu0 %v128, 126
    %v133 = vpop.permute.xlu0 %132
    %134 = vrot.lane.b32.xlu0 %v129, 126
    %v135 = vpop.permute.xlu0 %134
    %vm136 = vcmask 1031168
    %v137 = vsel %vm136, %v133, %v135
    %v139 = vadd.f32 %v107, %v137
    %s140 = sld [smem:[#allocation3 + $0x3]]
    %v141 = vstv %s140
    %v142 = vmul.f32 %v28, %v141
    %v143 = vmul.f32 %v29, %v141
    %s144 = sld [smem:[#allocation3 + $0xa]]
    %v145 = vstv %s144
    %v146 = vmul.f32 %v38, %v145
    %v147 = vmul.f32 %v39, %v145
    %v148 = vadd.f32 %v142, %v146
    %v149 = vadd.f32 %v143, %v147
    %s150 = sld [smem:[#allocation3 + $0x11]]
    %v151 = vstv %s150
    %v152 = vmul.f32 %v48, %v151
    %v153 = vmul.f32 %v49, %v151
    %v154 = vadd.f32 %v148, %v152
    %v155 = vadd.f32 %v149, %v153
    %s156 = sld [smem:[#allocation3 + $0x18]]
    %v157 = vstv %s156
    %v158 = vmul.f32 %v58, %v157
    %v159 = vmul.f32 %v59, %v157
    %v160 = vadd.f32 %v154, %v158
    %v161 = vadd.f32 %v155, %v159
    %164 = vrot.lane.b32.xlu0 %v160, 125
    %v165 = vpop.permute.xlu0 %164
    %166 = vrot.lane.b32.xlu0 %v161, 125
    %v167 = vpop.permute.xlu0 %166
    %vm168 = vcmask 1022976
    %v169 = vsel %vm168, %v165, %v167
    %v171 = vadd.f32 %v139, %v169
    %s172 = sld [smem:[#allocation3 + $0x4]]
    %v173 = vstv %s172
    %v174 = vmul.f32 %v28, %v173
    %v175 = vmul.f32 %v29, %v173
    %s176 = sld [smem:[#allocation3 + $0xb]]
    %v177 = vstv %s176
    %v178 = vmul.f32 %v38, %v177
    %v179 = vmul.f32 %v39, %v177
    %v180 = vadd.f32 %v174, %v178
    %v181 = vadd.f32 %v175, %v179
    %s182 = sld [smem:[#allocation3 + $0x12]]
    %v183 = vstv %s182
    %v184 = vmul.f32 %v48, %v183
    %v185 = vmul.f32 %v49, %v183
    %v186 = vadd.f32 %v180, %v184
    %v187 = vadd.f32 %v181, %v185
    %s188 = sld [smem:[#allocation3 + $0x19]]
    %v189 = vstv %s188
    %v190 = vmul.f32 %v58, %v189
    %v191 = vmul.f32 %v59, %v189
    %v192 = vadd.f32 %v186, %v190
    %v193 = vadd.f32 %v187, %v191
    %196 = vrot.lane.b32.xlu0 %v192, 124
    %v197 = vpop.permute.xlu0 %196
    %198 = vrot.lane.b32.xlu0 %v193, 124
    %v199 = vpop.permute.xlu0 %198
    %vm200 = vcmask 1014784
    %v201 = vsel %vm200, %v197, %v199
    %v203 = vadd.f32 %v171, %v201
    %s204 = sld [smem:[#allocation3 + $0x5]]
    %v205 = vstv %s204
    %v206 = vmul.f32 %v28, %v205
    %v207 = vmul.f32 %v29, %v205
    %s208 = sld [smem:[#allocation3 + $0xc]]
    %v209 = vstv %s208
    %v210 = vmul.f32 %v38, %v209
    %v211 = vmul.f32 %v39, %v209
    %v212 = vadd.f32 %v206, %v210
    %v213 = vadd.f32 %v207, %v211
    %s214 = sld [smem:[#allocation3 + $0x13]]
    %v215 = vstv %s214
    %v216 = vmul.f32 %v48, %v215
    %v217 = vmul.f32 %v49, %v215
    %v218 = vadd.f32 %v212, %v216
    %v219 = vadd.f32 %v213, %v217
    %s220 = sld [smem:[#allocation3 + $0x1a]]
    %v221 = vstv %s220
    %v222 = vmul.f32 %v58, %v221
    %v223 = vmul.f32 %v59, %v221
    %v224 = vadd.f32 %v218, %v222
    %v225 = vadd.f32 %v219, %v223
    %228 = vrot.lane.b32.xlu0 %v224, 123
    %v229 = vpop.permute.xlu0 %228
    %230 = vrot.lane.b32.xlu0 %v225, 123
    %v231 = vpop.permute.xlu0 %230
    %vm232 = vcmask 1006592
    %v233 = vsel %vm232, %v229, %v231
    %v235 = vadd.f32 %v203, %v233
    %s236 = sld [smem:[#allocation3 + $0x6]]
    %v237 = vstv %s236
    %v238 = vmul.f32 %v28, %v237
    %v239 = vmul.f32 %v29, %v237
    %s240 = sld [smem:[#allocation3 + $0xd]]
    %v241 = vstv %s240
    %v242 = vmul.f32 %v38, %v241
    %v243 = vmul.f32 %v39, %v241
    %v244 = vadd.f32 %v238, %v242
    %v245 = vadd.f32 %v239, %v243
    %s246 = sld [smem:[#allocation3 + $0x14]]
    %v247 = vstv %s246
    %v248 = vmul.f32 %v48, %v247
    %v249 = vmul.f32 %v49, %v247
    %v250 = vadd.f32 %v244, %v248
    %v251 = vadd.f32 %v245, %v249
    %s252 = sld [smem:[#allocation3 + $0x1b]]
    %v253 = vstv %s252
    %v254 = vmul.f32 %v58, %v253
    %v255 = vmul.f32 %v59, %v253
    %v256 = vadd.f32 %v250, %v254
    %v257 = vadd.f32 %v251, %v255
    %260 = vrot.lane.b32.xlu0 %v256, 122
    %v261 = vpop.permute.xlu0 %260
    %262 = vrot.lane.b32.xlu0 %v257, 122
    %v263 = vpop.permute.xlu0 %262
    %vm264 = vcmask 998400
    %v265 = vsel %vm264, %v261, %v263
    %v267 = vadd.f32 %v235, %v265
    %v268 = vtanh.pop %v267
    %269 = vst [vmem:[#allocation4] sm:$0xff] %v268
    // Predicated region
    $region10: #{tpu_custom_call.1} parent=1 // pred_check
      _
    $region11: #{tpu_custom_call.1} parent=1 // pred_check_branch
      %271 = sbr.rel (0) target = $region13
    $region12: #{tpu_custom_call.1} parent=1 // pred_region
      %273 = vsyncadd [#allocation5], 0
      %s275 = sshll.u32 [#allocation4], 4
      %s276 = int_to_ptr.vmem [resolvable:$true] %s275
      %s277 = sshll.u32 %s3, 4
      %s278 = int_to_ptr.hbm [resolvable:$true] %s277
      %280 = dma.vmem_to_hbm [thread:$0]  %s276, 128, %s278, [#allocation5]
    $region13: #{tpu_custom_call.1} parent=1 // pred_fallthru
      _
    // Predicated region
    $region14: #{tpu_custom_call.1} parent=1 // pred_check
      _
    $region15: #{tpu_custom_call.1} parent=1 // pred_check_branch
      %282 = sbr.rel (0) target = $region17
    $region16: #{tpu_custom_call.1} parent=1 // pred_region
      %284 = dma.done [#allocation5], 128
    $region17: #{tpu_custom_call.1} parent=1 // pred_fallthru
      _
    %285 = vsyncpa [#allocation5], 1

</llo_original>
